<compile_context>
chip_gen: v6e
topology: v6e:2x2x1
jax: 0.10.0
libtpu: 0.0.40
codegen_flags: <defaults>
</compile_context>

<pallas_src>
import jax
import jax.numpy as jnp
from jax.experimental import pallas as pl
from jax.experimental.pallas import tpu as pltpu


def _rms_partial_kernel(p_ref, t_ref, part_ref):
    # p_ref / t_ref: (G, 8, C) blocks in native dtype; cast in-kernel.
    diff = p_ref[...].astype(jnp.float32) - t_ref[...].astype(jnp.float32)
    sq = diff * diff
    # Reduce over the leading (vreg-group) dim only: pure VPU vreg adds,
    # no XLU full-reduce, no serializing scalar read-modify-write.
    part_ref[...] = jnp.sum(sq, axis=0)


def _vmem_capacity_bytes():
    try:
        info = pltpu.get_tpu_info()
        cap = getattr(info, "vmem_capacity_bytes", None)
        if cap:
            return int(cap)
    except Exception:
        pass
    return 64 * 1024 * 1024  # conservative fallback (v7x per-TC VMEM)


def _ceil_div(a, b):
    return -(-a // b)


def rms_loss(y_pred, y_true, max_rows_per_block=None):
    """sqrt(mean((y_pred - y_true)**2)) over all elements, matching
    torch.sqrt(nn.MSELoss()(y_pred, y_true)).

    `max_rows_per_block` optionally caps the row tile (test/tuning knob)."""
    assert y_pred.shape == y_true.shape
    total = y_pred.size
    assert total > 0

    p_item = jnp.dtype(y_pred.dtype).itemsize
    t_item = jnp.dtype(y_true.dtype).itemsize

    # ---- lane width C: largest "nice" multiple of 128 that divides the
    # element count (zero padding), else 512 with a zero-padded tail.
    C = 512
    for cand in (1024, 512, 256, 128):
        if total % cand == 0:
            C = cand
            break

    rows_needed = _ceil_div(total, C)
    rows_pad8 = _ceil_div(rows_needed, 8) * 8

    # ---- byte-budgeted row tile: 2 inputs x 2 pipeline buffers per block.
    vmem_cap = _vmem_capacity_bytes()
    budget = vmem_cap // 4                      # ~16 MiB v7x, ~32 MiB v5e/v6e
    bytes_per_row = 2 * C * (p_item + t_item)   # both inputs, double-buffered
    tm = max(8, (budget // bytes_per_row) // 8 * 8)
    tm = min(tm, rows_pad8)
    if max_rows_per_block is not None:
        tm = max(8, min(tm, (max_rows_per_block // 8) * 8))

    grid = _ceil_div(rows_needed, tm)
    padded_rows = grid * tm
    padded_total = padded_rows * C
    G = tm // 8                                  # vreg-groups per block

    # ---- lane-dense slab in NATIVE dtype (cast happens inside the kernel).
    def to_slab(x):
        flat = x.reshape(-1)
        if padded_total != total:
            flat = jnp.pad(flat, (0, padded_total - total))
        return flat.reshape(grid * G, 8, C)

    p_slab = to_slab(y_pred)
    t_slab = to_slab(y_true)

    # Raise the scoped VMEM limit to cover the chosen blocks (+ margin).
    vmem_needed = 2 * tm * C * (p_item + t_item) + 2 * 8 * C * 4 + (4 << 20)
    vmem_limit = int(min(max(vmem_needed, 16 << 20), vmem_cap * 3 // 4))

    partials = pl.pallas_call(
        _rms_partial_kernel,
        out_shape=jax.ShapeDtypeStruct((grid * 8, C), jnp.float32),
        grid_spec=pltpu.PrefetchScalarGridSpec(
            num_scalar_prefetch=0,
            grid=(grid,),
            in_specs=[
                pl.BlockSpec((G, 8, C), lambda i: (i, 0, 0)),
                pl.BlockSpec((G, 8, C), lambda i: (i, 0, 0)),
            ],
            # Each step owns its own lane-dense (8, C) partial -> independent
            # blocks, so the grid axis can be truly parallel (both TCs on v7x).
            out_specs=pl.BlockSpec((8, C), lambda i: (i, 0)),
        ),
        compiler_params=pltpu.CompilerParams(
            dimension_semantics=("parallel",),
            vmem_limit_bytes=vmem_limit,
        ),
    )(p_slab, t_slab)

    # Tiny final cross-lane reduce + sqrt in plain JAX (XLU work deferred out
    # of the per-step loop; zero padding contributes 0 to the sum).
    return jnp.sqrt(jnp.sum(partials, dtype=jnp.float32) / jnp.float32(total))


if __name__ == "__main__":
    key = jax.random.PRNGKey(0)
    k1, k2, k3, k4 = jax.random.split(key, 4)

    # Facial-keypoints-like shapes: batch=16, 68 keypoints * 2 coords = 136.
    y_pred = jax.random.normal(k1, (16, 136), dtype=jnp.float32)
    y_true = jax.random.normal(k2, (16, 136), dtype=jnp.float32)

    loss = jax.block_until_ready(rms_loss(y_pred, y_true))
    ref = jnp.sqrt(jnp.mean((y_pred - y_true) ** 2))
    assert jnp.allclose(loss, ref, rtol=1e-5, atol=1e-6), (loss, ref)

    # Exercise the multi-block (grid > 1) path and native bf16 streaming.
    yp2 = jax.random.normal(k3, (32, 136), dtype=jnp.bfloat16)
    yt2 = jax.random.normal(k4, (32, 136), dtype=jnp.bfloat16)
    loss2 = jax.block_until_ready(rms_loss(yp2, yt2, max_rows_per_block=8))
    ref2 = jnp.sqrt(jnp.mean(
        (yp2.astype(jnp.float32) - yt2.astype(jnp.float32)) ** 2))
    assert jnp.allclose(loss2, ref2, rtol=1e-3, atol=1e-3), (loss2, ref2)

    print("KERNEL_OK")
</pallas_src>

<mosaic_0001>
module attributes {stable_mosaic.version = 11 : i64} {
  func.func @_rms_partial_kernel(%arg0: i32, %arg1: memref<3x8x128xf32, #tpu.memory_space<vmem>>, %arg2: memref<3x8x128xf32, #tpu.memory_space<vmem>>, %arg3: memref<8x128xf32, #tpu.memory_space<vmem>>) attributes {dimension_semantics = [#tpu.dimension_semantics<parallel>], iteration_bounds = array<i64: 1>, scalar_prefetch = 0 : i64, scratch_operands = 0 : i64, tpu.core_type = #tpu.core_type<tc>, window_params = [{transform_indices = @transform_0, window_bounds = array<i64: 3, 8, 128>}, {transform_indices = @transform_1, window_bounds = array<i64: 3, 8, 128>}, {transform_indices = @transform_2, window_bounds = array<i64: 8, 128>}]} {
    %c0 = arith.constant 0 : index
    %c0_0 = arith.constant 0 : index
    %c0_1 = arith.constant 0 : index
    %0 = vector.load %arg1[%c0, %c0_0, %c0_1] : memref<3x8x128xf32, #tpu.memory_space<vmem>>, vector<3x8x128xf32>
    %c0_2 = arith.constant 0 : index
    %c0_3 = arith.constant 0 : index
    %c0_4 = arith.constant 0 : index
    %1 = vector.load %arg2[%c0_2, %c0_3, %c0_4] : memref<3x8x128xf32, #tpu.memory_space<vmem>>, vector<3x8x128xf32>
    %2 = arith.subf %0, %1 : vector<3x8x128xf32>
    %3 = arith.mulf %2, %2 : vector<3x8x128xf32>
    %cst = arith.constant dense<0.000000e+00> : vector<8x128xf32>
    %4 = vector.multi_reduction <add>, %3, %cst [0] : vector<3x8x128xf32> to vector<8x128xf32>
    %c0_5 = arith.constant 0 : index
    %c0_6 = arith.constant 0 : index
    %5 = vector.load %arg3[%c0_5, %c0_6] : memref<8x128xf32, #tpu.memory_space<vmem>>, vector<8x128xf32>
    tpu.vector_store %arg3[%c0_5, %c0_6], %4 {strides = array<i32>} : memref<8x128xf32, #tpu.memory_space<vmem>>, vector<8x128xf32>,
    return
  }
  func.func @transform_0(%arg0: i32) -> (i32, i32, i32) {
    %c0_i32 = arith.constant 0 : i32
    %c0_i32_0 = arith.constant 0 : i32
    %c0_i32_1 = arith.constant 0 : i32
    return %arg0, %c0_i32, %c0_i32_0 : i32, i32, i32
  }
  func.func @transform_1(%arg0: i32) -> (i32, i32, i32) {
    %c0_i32 = arith.constant 0 : i32
    %c0_i32_0 = arith.constant 0 : i32
    %c0_i32_1 = arith.constant 0 : i32
    return %arg0, %c0_i32, %c0_i32_0 : i32, i32, i32
  }
  func.func @transform_2(%arg0: i32) -> (i32, i32) {
    %c0_i32 = arith.constant 0 : i32
    %c0_i32_0 = arith.constant 0 : i32
    return %arg0, %c0_i32 : i32, i32
  }
}

</mosaic_0001>

<llo_original>
// kernel: tpu_custom_call.1
$region0: #{tpu_custom_call.1}
  #allocation0 [shape = 'u32[]', space=smem, size = 0x4, offset = 0x4, fixed_abs, tag = 'smem constant byte address 0x4 - core index']
  #allocation1 [shape = 'u32[144,128]{1,0:T(1,128)}', space=vmem, size = 0x12000, scoped, tag = 'internal scratch']
  %s0 = inlined_call_operand.hbm [shape: f32[3,8,128], index: 0, kind: input, shape index: {}]
  %s1 = inlined_call_operand.hbm [shape: f32[3,8,128], index: 1, kind: input, shape index: {}]
  %s2 = inlined_call_operand.hbm [shape: f32[8,128], index: 2, kind: output, shape index: {}]
  %s3 = sld [smem:[#allocation0]]
  $region26: #{tpu_custom_call.1} parent=0
    _
  %s5 = ssub.s32 1, %s3
  %s6 = scalar_select 0, %s5, %s3
  $region1: #{tpu_custom_call.1} parent=0
    #allocation2 [shape = 'u8[12288]{0}', space=vmem, size = 0x3000, scoped, tag = 'input window, operand 0, single buffered']
    #allocation3 [shape = 's32[1]{0}', space=sflag, size = 0x4, scoped, tag = 'scoped memory for tpu_custom_call.1']
    #allocation4 [shape = 's32[1]{0}', space=sflag, size = 0x4, scoped, tag = 'scoped memory for tpu_custom_call.1']
    #allocation5 [shape = 'u8[12288]{0}', space=vmem, size = 0x3000, scoped, tag = 'input window, operand 1, single buffered']
    #allocation6 [shape = 's32[1]{0}', space=sflag, size = 0x4, scoped, tag = 'scoped memory for tpu_custom_call.1']
    #allocation7 [shape = 'u8[4096]{0}', space=vmem, size = 0x1000, scoped, tag = 'output window, operand 0, single buffered']
    %7 = vsyncpa [#allocation3], 0
    %8 = vsyncpa [#allocation6], 0
    %9 = vsyncpa [#allocation4], 0
    // Predicated region
    $region2: #{tpu_custom_call.1} parent=1 // pred_check
      _
    $region3: #{tpu_custom_call.1} parent=1 // pred_check_branch
      %11 = sbr.rel (0) target = $region5
    $region4: #{tpu_custom_call.1} parent=1 // pred_region
      %s13 = ssub.s32 384, 384
      %14 = vsyncadd [#allocation3], %s13
      %s15 = sshll.u32 [#allocation2], 4
      %s16 = int_to_ptr.vmem [resolvable:$true] %s15
      %21 = dma.hbm_to_vmem [thread:$0]  %s0, 384, %s16, [#allocation3], 128, 128, 8
    $region5: #{tpu_custom_call.1} parent=1 // pred_fallthru
      _
    // Predicated region
    $region6: #{tpu_custom_call.1} parent=1 // pred_check
      _
    $region7: #{tpu_custom_call.1} parent=1 // pred_check_branch
      %23 = sbr.rel (0) target = $region9
    $region8: #{tpu_custom_call.1} parent=1 // pred_region
      %s25 = ssub.s32 384, 384
      %26 = vsyncadd [#allocation6], %s25
      %s27 = sshll.u32 [#allocation5], 4
      %s28 = int_to_ptr.vmem [resolvable:$true] %s27
      %33 = dma.hbm_to_vmem [thread:$0]  %s1, 384, %s28, [#allocation6], 128, 128, 8
    $region9: #{tpu_custom_call.1} parent=1 // pred_fallthru
      _
    // Predicated region
    $region10: #{tpu_custom_call.1} parent=1 // pred_check
      _
    $region11: #{tpu_custom_call.1} parent=1 // pred_check_branch
      %35 = sbr.rel (0) target = $region13
    $region12: #{tpu_custom_call.1} parent=1 // pred_region
      %36 = dma.done [#allocation3], 384
    $region13: #{tpu_custom_call.1} parent=1 // pred_fallthru
      _
    // Predicated region
    $region14: #{tpu_custom_call.1} parent=1 // pred_check
      _
    $region15: #{tpu_custom_call.1} parent=1 // pred_check_branch
      %38 = sbr.rel (0) target = $region17
    $region16: #{tpu_custom_call.1} parent=1 // pred_region
      %39 = dma.done [#allocation6], 384
    $region17: #{tpu_custom_call.1} parent=1 // pred_fallthru
      _
    %v40 = vld [vmem:[#allocation2] sm:$0xff]
    %v41 = vld [vmem:[#allocation2 + $0x8] sm:$0xff]
    %v42 = vld [vmem:[#allocation2 + $0x10] sm:$0xff]
    %v43 = vld [vmem:[#allocation5] sm:$0xff]
    %v44 = vld [vmem:[#allocation5 + $0x8] sm:$0xff]
    %v45 = vld [vmem:[#allocation5 + $0x10] sm:$0xff]
    %v46 = vsub.f32 %v40, %v43
    %v47 = vsub.f32 %v41, %v44
    %v48 = vsub.f32 %v42, %v45
    %v49 = vmul.f32 %v46, %v46
    %v50 = vmul.f32 %v47, %v47
    %v51 = vmul.f32 %v48, %v48
    %v52 = vadd.f32 %v49, %v50
    %v53 = vadd.f32 %v52, %v51
    %54 = vst [vmem:[#allocation7] sm:$0xff] %v53
    // Predicated region
    $region18: #{tpu_custom_call.1} parent=1 // pred_check
      _
    $region19: #{tpu_custom_call.1} parent=1 // pred_check_branch
      %56 = sbr.rel (0) target = $region21
    $region20: #{tpu_custom_call.1} parent=1 // pred_region
      %s58 = ssub.s32 128, 128
      %59 = vsyncadd [#allocation4], %s58
      %s61 = sshll.u32 [#allocation7], 4
      %s62 = int_to_ptr.vmem [resolvable:$true] %s61
      %64 = dma.vmem_to_hbm [thread:$0]  %s62, 128, %s2, [#allocation4]
    $region21: #{tpu_custom_call.1} parent=1 // pred_fallthru
      _
    // Predicated region
    $region22: #{tpu_custom_call.1} parent=1 // pred_check
      _
    $region23: #{tpu_custom_call.1} parent=1 // pred_check_branch
      %66 = sbr.rel (0) target = $region25
    $region24: #{tpu_custom_call.1} parent=1 // pred_region
      %67 = dma.done [#allocation4], 128
    $region25: #{tpu_custom_call.1} parent=1 // pred_fallthru
      _
    %68 = vsyncpa [#allocation3], 1
    %69 = vsyncpa [#allocation6], 1
    %70 = vsyncpa [#allocation4], 1

</llo_original>
